<compile_context>
chip_gen: v7x
topology: tpu7x:2x2x1
jax: 0.10.0
libtpu: 0.0.40
codegen_flags: <defaults>
</compile_context>

<pallas_src>
import functools
import math

import jax
import jax.numpy as jnp
from jax.experimental import pallas as pl
from jax.experimental.pallas import tpu as pltpu

OUT_PAD = 128  # lane-dense padded width for the 2-wide output


def _round_up(x, m):
    return (x + m - 1) // m * m


def _pick_b_tile(bp, b_tile_max):
    """8-aligned divisor of bp, <= b_tile_max, and >=2 tiles when bp >= 16."""
    m = bp // 8
    cap = max(1, min(b_tile_max // 8, m))
    if m >= 2:
        cap = min(cap, max(1, m // 2))   # guarantee >=2 grid tiles (megacore)
    for d in range(cap, 0, -1):
        if m % d == 0:
            return 8 * d
    return 8


def _pick_k_tile(d_in, k_target):
    """(nk, tk, d_in_padded): tk is full-extent or a 128-multiple divisor."""
    if d_in <= k_target:
        return 1, d_in, d_in
    d_in_p = _round_up(d_in, 128)
    tk = 128
    for cand in range((min(k_target, d_in_p) // 128) * 128, 127, -128):
        if d_in_p % cand == 0:
            tk = cand
            break
    return d_in_p // tk, tk, d_in_p


# ----------------------------- Pallas kernel ------------------------------ #
def fused_clip_regressor_kernel(img_ref, wproj_ref, w1_ref, bias_ref, w2_ref,
                                o_ref, feats_acc, *, hidden, d_true):
    k = pl.program_id(1)

    @pl.when(k == 0)
    def _init():
        feats_acc[...] = jnp.zeros_like(feats_acc)

    # Frozen-encoder stand-in (K-tiled): cast the f32 image tile to bf16 in
    # VMEM (VPU work hidden under the MXU) and accumulate in f32.
    feats_acc[...] += jnp.dot(img_ref[...].astype(jnp.bfloat16), wproj_ref[...],
                              preferred_element_type=jnp.float32)

    @pl.when(k == pl.num_programs(1) - 1)
    def _epilogue():
        feats = feats_acc[...]                                   # (Bt, Dp) f32

        # LayerNorm(embed_dim, eps=1e-6), affine already folded into W1/b1.
        # Padded lanes of feats are exactly 0, so sums over the padded width
        # with a true-D divisor give the correct mean / biased variance.
        inv_d = 1.0 / d_true
        mean = jnp.sum(feats, axis=-1, keepdims=True) * inv_d
        var = jnp.sum(feats * feats, axis=-1, keepdims=True) * inv_d - mean * mean
        # Padded (all-zero) batch rows get var=0 -> rsqrt(1e-6)~1e3: finite,
        # and those rows are sliced away in the wrapper.
        xn = (feats - mean) * jax.lax.rsqrt(var + 1e-6)

        # Linear(embed_dim -> 512) with folded LN affine.
        b1 = bias_ref[:, :hidden]
        h = jnp.dot(xn.astype(jnp.bfloat16), w1_ref[...],
                    preferred_element_type=jnp.float32) + b1

        # Exact erf-based GELU (PyTorch nn.GELU() default).
        h = 0.5 * h * (1.0 + jax.lax.erf(h * (1.0 / math.sqrt(2.0))))

        # Linear(512 -> 2), zero-padded to 128 output lanes, then Tanh.
        b2 = bias_ref[:, hidden:]
        y = jnp.dot(h.astype(jnp.bfloat16), w2_ref[...],
                    preferred_element_type=jnp.float32) + b2
        o_ref[...] = jnp.tanh(y)                                 # (Bt, 128)


# ------------------------------- wrapper ----------------------------------- #
def clip_regressor_forward(imgs, w_proj, gamma, beta, w1, b1, w2, b2,
                           *, b_tile_max=256, k_target=2048):
    """Fused forward: stand-in CLIP encoder + regression head in one kernel.

    imgs:   (B, C, H, W) float32
    w_proj: (C*H*W, D)   stand-in encoder projection (frozen)
    head:   LayerNorm(D, eps=1e-6) -> Linear(D,512) -> GELU -> Linear(512,2) -> Tanh
    """
    B = imgs.shape[0]
    imgs_flat = imgs.reshape(B, -1)
    d_in = imgs_flat.shape[1]
    D = w_proj.shape[1]
    H = w1.shape[1]
    out_dim = w2.shape[1]

    # --- tiling -------------------------------------------------------------
    Bp = _round_up(B, 8)                         # pad batch to 8 only
    b_tile = _pick_b_tile(Bp, b_tile_max)
    num_b_tiles = Bp // b_tile
    nk, tk, d_in_p = _pick_k_tile(d_in, k_target)
    Dp = _round_up(D, 128)                       # lane-dense embed dim

    # --- inputs (f32 images; cast to bf16 happens inside the kernel) --------
    if Bp != B or d_in_p != d_in:
        imgs_flat = jnp.pad(imgs_flat, ((0, Bp - B), (0, d_in_p - d_in)))
    imgs_flat = imgs_flat.astype(jnp.float32)

    # --- frozen-weight prep (one-time host-side transforms) -----------------
    wproj_bf16 = jnp.pad(
        w_proj, ((0, d_in_p - d_in), (0, Dp - D))).astype(jnp.bfloat16)
    # Fold LayerNorm affine into the first Linear: W1' = gamma*W1, b1' = b1+beta@W1.
    w1_folded = (gamma[:, None].astype(jnp.float32) * w1.astype(jnp.float32))
    w1_bf16 = jnp.pad(w1_folded, ((0, Dp - D), (0, 0))).astype(jnp.bfloat16)
    b1_folded = (b1.astype(jnp.float32)
                 + beta.astype(jnp.float32) @ w1.astype(jnp.float32))
    w2_pad = jnp.pad(w2, ((0, 0), (0, OUT_PAD - out_dim))).astype(jnp.bfloat16)
    bias_pack = jnp.concatenate(
        [b1_folded.reshape(1, H),
         jnp.pad(b2.reshape(1, out_dim), ((0, 0), (0, OUT_PAD - out_dim)))],
        axis=1).astype(jnp.float32)                              # (1, H+128)

    # --- VMEM budget / cost hint --------------------------------------------
    vmem_needed = (
        2 * b_tile * tk * 4            # image tile (f32), double-buffered
        + 2 * tk * Dp * 2              # wproj K-slab
        + 2 * Dp * H * 2               # W1
        + 2 * (H + OUT_PAD) * 4        # bias pack
        + 2 * H * OUT_PAD * 2          # W2
        + 2 * b_tile * OUT_PAD * 4     # output tile
        + b_tile * Dp * 4)             # feats accumulator scratch
    vmem_limit = int(min(max(int(vmem_needed * 1.3) + (1 << 20), 8 << 20),
                         64 << 20))

    cost = pl.CostEstimate(
        flops=2 * Bp * (d_in_p * Dp + Dp * H + H * OUT_PAD),
        transcendentals=Bp * (H + OUT_PAD + 1),
        bytes_accessed=(Bp * d_in_p * 4 + d_in_p * Dp * 2 + Dp * H * 2
                        + (H + OUT_PAD) * 4 + H * OUT_PAD * 2
                        + Bp * OUT_PAD * 4),
    )

    grid_spec = pltpu.PrefetchScalarGridSpec(
        num_scalar_prefetch=0,
        grid=(num_b_tiles, nk),
        in_specs=[
            pl.BlockSpec((b_tile, tk), lambda i, k: (i, k)),       # images
            pl.BlockSpec((tk, Dp), lambda i, k: (k, 0)),           # encoder proj
            pl.BlockSpec((Dp, H), lambda i, k: (0, 0)),            # W1 (folded LN)
            pl.BlockSpec((1, H + OUT_PAD), lambda i, k: (0, 0)),   # b1 | b2 (padded)
            pl.BlockSpec((H, OUT_PAD), lambda i, k: (0, 0)),       # W2 (padded)
        ],
        out_specs=pl.BlockSpec((b_tile, OUT_PAD), lambda i, k: (i, 0)),
        scratch_shapes=[pltpu.VMEM((b_tile, Dp), jnp.float32)],    # feats acc
    )

    out_padded = pl.pallas_call(
        functools.partial(fused_clip_regressor_kernel, hidden=H,
                          d_true=float(D)),
        grid_spec=grid_spec,
        out_shape=jax.ShapeDtypeStruct((Bp, OUT_PAD), jnp.float32),
        compiler_params=pltpu.CompilerParams(
            dimension_semantics=("parallel", "arbitrary"),
            vmem_limit_bytes=vmem_limit),
        cost_estimate=cost,
    )(imgs_flat, wproj_bf16, w1_bf16, bias_pack, w2_pad)

    # Drop batch padding and the zero-padded output lanes.
    return out_padded[:B, :out_dim]


# --------------------------------- main ------------------------------------ #
if __name__ == "__main__":
    key = jax.random.PRNGKey(0)
    k_img, k_proj, k_w1, k_b1, k_w2, k_b2 = jax.random.split(key, 6)

    # Small shapes consistent with the forward pass.
    B, C, Hs, Ws = 2, 3, 16, 16          # NCHW images (torch convention)
    embed_dim = 32                        # clip_model.visual.output_dim (synthetic)
    hidden = 512
    out_dim = 2

    imgs = jax.random.normal(k_img, (B, C, Hs, Ws), dtype=jnp.float32)

    # TODO(synk): the frozen pretrained CLIP visual backbone has no clean
    # in-script Pallas equivalent; a deterministic linear projection stands in
    # as the feature extractor (bf16 instead of fp16 for the .half() path).
    w_proj = jax.random.normal(k_proj, (C * Hs * Ws, embed_dim), jnp.float32) * 0.02

    # Head parameters (deterministic synthetic init, matching fresh nn.LayerNorm).
    gamma = jnp.ones((embed_dim,), jnp.float32)          # LayerNorm weight
    beta = jnp.zeros((embed_dim,), jnp.float32)          # LayerNorm bias
    w1 = jax.random.normal(k_w1, (embed_dim, hidden), jnp.float32) / math.sqrt(embed_dim)
    b1 = jax.random.normal(k_b1, (hidden,), jnp.float32) * 0.01
    w2 = jax.random.normal(k_w2, (hidden, out_dim), jnp.float32) / math.sqrt(hidden)
    b2 = jax.random.normal(k_b2, (out_dim,), jnp.float32) * 0.01

    # Fused forward pass (encoder stand-in + head) in one Pallas kernel.
    out = clip_regressor_forward(imgs, w_proj, gamma, beta, w1, b1, w2, b2)
    out = jax.block_until_ready(out)

    # Reference in plain JAX: spec-form LN (unfolded affine, biased variance),
    # same bf16-operand / f32-accumulate matmul numerics as the kernel.
    imgs_flat = imgs.reshape(B, -1).astype(jnp.bfloat16)
    feats = jnp.dot(imgs_flat, w_proj.astype(jnp.bfloat16),
                    preferred_element_type=jnp.float32)
    mean = jnp.mean(feats, axis=-1, keepdims=True)
    var = jnp.mean((feats - mean) ** 2, axis=-1, keepdims=True)
    xn = (feats - mean) * jax.lax.rsqrt(var + 1e-6) * gamma + beta
    h = jnp.dot(xn.astype(jnp.bfloat16), w1.astype(jnp.bfloat16),
                preferred_element_type=jnp.float32) + b1
    h = 0.5 * h * (1.0 + jax.lax.erf(h / math.sqrt(2.0)))
    ref = jnp.tanh(jnp.dot(h.astype(jnp.bfloat16), w2.astype(jnp.bfloat16),
                           preferred_element_type=jnp.float32) + b2)

    assert out.shape == (B, out_dim)
    assert jnp.allclose(out, ref, atol=1e-2, rtol=1e-2), (
        f"max abs err = {jnp.max(jnp.abs(out - ref))}")

    print("KERNEL_OK")
</pallas_src>

<mosaic_0001>
module attributes {stable_mosaic.version = 11 : i64} {
  func.func @fused_clip_regressor_kernel(%arg0: i32, %arg1: i32, %arg2: memref<8x768xf32, #tpu.memory_space<vmem>>, %arg3: memref<768x128xbf16, #tpu.memory_space<vmem>>, %arg4: memref<128x512xbf16, #tpu.memory_space<vmem>>, %arg5: memref<1x640xf32, #tpu.memory_space<vmem>>, %arg6: memref<512x128xbf16, #tpu.memory_space<vmem>>, %arg7: memref<8x128xf32, #tpu.memory_space<vmem>>, %arg8: memref<8x128xf32, #tpu.memory_space<vmem>>) attributes {dimension_semantics = [#tpu.dimension_semantics<parallel>, #tpu.dimension_semantics<arbitrary>], iteration_bounds = array<i64: 1, 1>, scalar_prefetch = 0 : i64, scratch_operands = 1 : i64, tpu.core_type = #tpu.core_type<tc>, window_params = [{transform_indices = @transform_0, window_bounds = array<i64: 8, 768>}, {transform_indices = @transform_1, window_bounds = array<i64: 768, 128>}, {pipeline_mode = #tpu.pipeline_mode<synchronous>, transform_indices = @transform_2, window_bounds = array<i64: 128, 512>}, {pipeline_mode = #tpu.pipeline_mode<synchronous>, transform_indices = @transform_3, window_bounds = array<i64: 1, 640>}, {pipeline_mode = #tpu.pipeline_mode<synchronous>, transform_indices = @transform_4, window_bounds = array<i64: 512, 128>}, {transform_indices = @transform_5, window_bounds = array<i64: 8, 128>}]} {
    %c0_i32 = arith.constant 0 : i32
    %0 = arith.cmpi eq, %arg1, %c0_i32 : i32
    %1 = arith.extui %0 : i1 to i32
    %c0_i32_0 = arith.constant 0 : i32
    %2 = arith.cmpi ne, %1, %c0_i32_0 : i32
    scf.if %2 {
      %cst_10 = arith.constant 0.000000e+00 : f32
      %13 = vector.broadcast %cst_10 : f32 to vector<8x128xf32>
      %c0_11 = arith.constant 0 : index
      %c0_12 = arith.constant 0 : index
      %14 = vector.load %arg8[%c0_11, %c0_12] : memref<8x128xf32, #tpu.memory_space<vmem>>, vector<8x128xf32>
      tpu.vector_store %arg8[%c0_11, %c0_12], %13 {strides = array<i32>} : memref<8x128xf32, #tpu.memory_space<vmem>>, vector<8x128xf32>,
    } else {
    }
    %c0 = arith.constant 0 : index
    %c0_1 = arith.constant 0 : index
    %3 = vector.load %arg8[%c0, %c0_1] : memref<8x128xf32, #tpu.memory_space<vmem>>, vector<8x128xf32>
    %c0_2 = arith.constant 0 : index
    %c0_3 = arith.constant 0 : index
    %4 = vector.load %arg2[%c0_2, %c0_3] : memref<8x768xf32, #tpu.memory_space<vmem>>, vector<8x768xf32>
    %5 = arith.truncf %4 : vector<8x768xf32> to vector<8x768xbf16>
    %c0_4 = arith.constant 0 : index
    %c0_5 = arith.constant 0 : index
    %6 = vector.load %arg3[%c0_4, %c0_5] : memref<768x128xbf16, #tpu.memory_space<vmem>>, vector<768x128xbf16>
    %cst = arith.constant dense<0.000000e+00> : vector<8x128xf32>
    %7 = tpu.matmul %5, %6, %cst {dimension_numbers = #tpu.dot_dimension_numbers<[1], [0], [0], [1], [0, 0, 1, 1], [], []>} : vector<8x768xbf16>, vector<768x128xbf16>, vector<8x128xf32> -> vector<8x128xf32>
    %8 = arith.addf %3, %7 : vector<8x128xf32>
    %c0_6 = arith.constant 0 : index
    %c0_7 = arith.constant 0 : index
    %9 = vector.load %arg8[%c0_6, %c0_7] : memref<8x128xf32, #tpu.memory_space<vmem>>, vector<8x128xf32>
    tpu.vector_store %arg8[%c0_6, %c0_7], %8 {strides = array<i32>} : memref<8x128xf32, #tpu.memory_space<vmem>>, vector<8x128xf32>,
    %c0_i32_8 = arith.constant 0 : i32
    %10 = arith.cmpi eq, %arg1, %c0_i32_8 : i32
    %11 = arith.extui %10 : i1 to i32
    %c0_i32_9 = arith.constant 0 : i32
    %12 = arith.cmpi ne, %11, %c0_i32_9 : i32
    scf.if %12 {
      %c0_10 = arith.constant 0 : index
      %c0_11 = arith.constant 0 : index
      %13 = vector.load %arg8[%c0_10, %c0_11] : memref<8x128xf32, #tpu.memory_space<vmem>>, vector<8x128xf32>
      %cst_12 = arith.constant dense<0.000000e+00> : vector<8xf32>
      %14 = vector.multi_reduction <add>, %13, %cst_12 [1] : vector<8x128xf32> to vector<8xf32>
      %15 = vector.shape_cast %14 : vector<8xf32> to vector<8x1xf32>
      %cst_13 = arith.constant 3.125000e-02 : f32
      %16 = vector.broadcast %cst_13 : f32 to vector<8x1xf32>
      %17 = arith.mulf %15, %16 : vector<8x1xf32>
      %18 = arith.mulf %13, %13 : vector<8x128xf32>
      %cst_14 = arith.constant dense<0.000000e+00> : vector<8xf32>
      %19 = vector.multi_reduction <add>, %18, %cst_14 [1] : vector<8x128xf32> to vector<8xf32>
      %20 = vector.shape_cast %19 : vector<8xf32> to vector<8x1xf32>
      %cst_15 = arith.constant 3.125000e-02 : f32
      %21 = vector.broadcast %cst_15 : f32 to vector<8x1xf32>
      %22 = arith.mulf %20, %21 : vector<8x1xf32>
      %23 = arith.mulf %17, %17 : vector<8x1xf32>
      %24 = arith.subf %22, %23 : vector<8x1xf32>
      %25 = vector.broadcast %17 : vector<8x1xf32> to vector<8x128xf32>
      %26 = arith.subf %13, %25 : vector<8x128xf32>
      %cst_16 = arith.constant 9.99999997E-7 : f32
      %27 = vector.broadcast %cst_16 : f32 to vector<8x1xf32>
      %28 = arith.addf %24, %27 : vector<8x1xf32>
      %29 = math.rsqrt %28 : vector<8x1xf32>
      %30 = vector.broadcast %29 : vector<8x1xf32> to vector<8x128xf32>
      %31 = arith.mulf %26, %30 : vector<8x128xf32>
      %c0_17 = arith.constant 0 : index
      %c0_18 = arith.constant 0 : index
      %32 = vector.load %arg5[%c0_17, %c0_18] : memref<1x640xf32, #tpu.memory_space<vmem>>, vector<1x512xf32>
      %33 = arith.truncf %31 : vector<8x128xf32> to vector<8x128xbf16>
      %c0_19 = arith.constant 0 : index
      %c0_20 = arith.constant 0 : index
      %34 = vector.load %arg4[%c0_19, %c0_20] : memref<128x512xbf16, #tpu.memory_space<vmem>>, vector<128x512xbf16>
      %cst_21 = arith.constant dense<0.000000e+00> : vector<8x512xf32>
      %35 = tpu.matmul %33, %34, %cst_21 {dimension_numbers = #tpu.dot_dimension_numbers<[1], [0], [0], [1], [0, 0, 1, 1], [], []>} : vector<8x128xbf16>, vector<128x512xbf16>, vector<8x512xf32> -> vector<8x512xf32>
      %36 = vector.broadcast %32 : vector<1x512xf32> to vector<8x512xf32>
      %37 = arith.addf %35, %36 : vector<8x512xf32>
      %cst_22 = arith.constant 5.000000e-01 : f32
      %38 = vector.broadcast %cst_22 : f32 to vector<8x512xf32>
      %39 = arith.mulf %38, %37 : vector<8x512xf32>
      %cst_23 = arith.constant 0.707106769 : f32
      %40 = vector.broadcast %cst_23 : f32 to vector<8x512xf32>
      %41 = arith.mulf %37, %40 : vector<8x512xf32>
      %42 = math.erf %41 : vector<8x512xf32>
      %cst_24 = arith.constant 1.000000e+00 : f32
      %43 = vector.broadcast %cst_24 : f32 to vector<8x512xf32>
      %44 = arith.addf %43, %42 : vector<8x512xf32>
      %45 = arith.mulf %39, %44 : vector<8x512xf32>
      %c0_25 = arith.constant 0 : index
      %c512 = arith.constant 512 : index
      %46 = vector.load %arg5[%c0_25, %c512] : memref<1x640xf32, #tpu.memory_space<vmem>>, vector<1x128xf32>
      %47 = arith.truncf %45 : vector<8x512xf32> to vector<8x512xbf16>
      %c0_26 = arith.constant 0 : index
      %c0_27 = arith.constant 0 : index
      %48 = vector.load %arg6[%c0_26, %c0_27] : memref<512x128xbf16, #tpu.memory_space<vmem>>, vector<512x128xbf16>
      %cst_28 = arith.constant dense<0.000000e+00> : vector<8x128xf32>
      %49 = tpu.matmul %47, %48, %cst_28 {dimension_numbers = #tpu.dot_dimension_numbers<[1], [0], [0], [1], [0, 0, 1, 1], [], []>} : vector<8x512xbf16>, vector<512x128xbf16>, vector<8x128xf32> -> vector<8x128xf32>
      %50 = vector.broadcast %46 : vector<1x128xf32> to vector<8x128xf32>
      %51 = arith.addf %49, %50 : vector<8x128xf32>
      %52 = math.tanh %51 : vector<8x128xf32>
      %c0_29 = arith.constant 0 : index
      %c0_30 = arith.constant 0 : index
      %53 = vector.load %arg7[%c0_29, %c0_30] : memref<8x128xf32, #tpu.memory_space<vmem>>, vector<8x128xf32>
      tpu.vector_store %arg7[%c0_29, %c0_30], %52 {strides = array<i32>} : memref<8x128xf32, #tpu.memory_space<vmem>>, vector<8x128xf32>,
    } else {
    }
    return
  }
  func.func @transform_0(%arg0: i32, %arg1: i32) -> (i32, i32) {
    %c0_i32 = arith.constant 0 : i32
    return %arg0, %arg1 : i32, i32
  }
  func.func @transform_1(%arg0: i32, %arg1: i32) -> (i32, i32) {
    %c0_i32 = arith.constant 0 : i32
    %c0_i32_0 = arith.constant 0 : i32
    return %arg1, %c0_i32 : i32, i32
  }
  func.func @transform_2(%arg0: i32, %arg1: i32) -> (i32, i32) {
    %c0_i32 = arith.constant 0 : i32
    %c0_i32_0 = arith.constant 0 : i32
    %c0_i32_1 = arith.constant 0 : i32
    return %c0_i32, %c0_i32_0 : i32, i32
  }
  func.func @transform_3(%arg0: i32, %arg1: i32) -> (i32, i32) {
    %c0_i32 = arith.constant 0 : i32
    %c0_i32_0 = arith.constant 0 : i32
    %c0_i32_1 = arith.constant 0 : i32
    return %c0_i32, %c0_i32_0 : i32, i32
  }
  func.func @transform_4(%arg0: i32, %arg1: i32) -> (i32, i32) {
    %c0_i32 = arith.constant 0 : i32
    %c0_i32_0 = arith.constant 0 : i32
    %c0_i32_1 = arith.constant 0 : i32
    return %c0_i32, %c0_i32_0 : i32, i32
  }
  func.func @transform_5(%arg0: i32, %arg1: i32) -> (i32, i32) {
    %c0_i32 = arith.constant 0 : i32
    %c0_i32_0 = arith.constant 0 : i32
    return %arg0, %c0_i32 : i32, i32
  }
}

</mosaic_0001>

<llo_original>
// kernel: tpu_custom_call.1
$region0: #{tpu_custom_call.1}
  #allocation0 [shape = 'u32[]', space=smem, size = 0x4, offset = 0x4, fixed_abs, tag = 'smem constant byte address 0x4 - core index']
  #allocation1 [shape = 'u32[144,128]{1,0:T(1,128)}', space=vmem, size = 0x12000, scoped, tag = 'internal scratch']
  #allocation2 [shape = 'f32[8,128]{1,0:T(8,128)}', space=vmem, size = 0x1000, scoped, tag = 'scratch operand']
  %s0 = inlined_call_operand.hbm [shape: f32[8,768], index: 0, kind: input, shape index: {}]
  %s1 = inlined_call_operand.hbm [shape: bf16[768,128], index: 1, kind: input, shape index: {}]
  %s2 = inlined_call_operand.hbm [shape: bf16[128,512], index: 2, kind: input, shape index: {}]
  %s3 = inlined_call_operand.vmem [shape: f32[1,640], index: 3, kind: input, shape index: {}]
  %s4 = inlined_call_operand.hbm [shape: bf16[512,128], index: 4, kind: input, shape index: {}]
  %s5 = inlined_call_operand.hbm [shape: f32[8,128], index: 5, kind: output, shape index: {}]
  %s6 = sld [smem:[#allocation0]]
  $region54: #{tpu_custom_call.1} parent=0
    _
  %s8 = ssub.s32 1, %s6
  %s9 = scalar_select 0, %s8, %s6
  $region1: #{tpu_custom_call.1} parent=0
    #allocation3 [shape = 'u8[24576]{0}', space=vmem, size = 0x6000, scoped, tag = 'input window, operand 0, single buffered']
    #allocation4 [shape = 's32[1]{0}', space=sflag, size = 0x4, scoped, tag = 'scoped memory for tpu_custom_call.1']
    #allocation5 [shape = 's32[1]{0}', space=sflag, size = 0x4, scoped, tag = 'scoped memory for tpu_custom_call.1']
    #allocation6 [shape = 'u8[196608]{0}', space=vmem, size = 0x30000, scoped, tag = 'input window, operand 1, single buffered']
    #allocation7 [shape = 's32[1]{0}', space=sflag, size = 0x4, scoped, tag = 'scoped memory for tpu_custom_call.1']
    #allocation8 [shape = 'u8[131072]{0}', space=vmem, size = 0x20000, scoped, tag = 'input window, operand 2, single buffered']
    #allocation9 [shape = 'u8[131072]{0}', space=vmem, size = 0x20000, scoped, tag = 'input window, operand 4, single buffered']
    #allocation10 [shape = 's32[1]{0}', space=sflag, size = 0x4, scoped, tag = 'scoped memory for tpu_custom_call.1']
    #allocation11 [shape = 'u8[4096]{0}', space=vmem, size = 0x1000, scoped, tag = 'output window, operand 0, single buffered']
    %10 = vsyncpa [#allocation4], 0
    %11 = vsyncpa [#allocation7], 0
    %12 = vsyncpa [#allocation10], 0
    %13 = vsyncpa [#allocation5], 0
    // Predicated region
    $region2: #{tpu_custom_call.1} parent=1 // pred_check
      _
    $region3: #{tpu_custom_call.1} parent=1 // pred_check_branch
      %15 = sbr.rel (0) target = $region5
    $region4: #{tpu_custom_call.1} parent=1 // pred_region
      %s17 = ssub.s32 768, 768
      %18 = vsyncadd [#allocation4], %s17
      %s20 = sshll.u32 [#allocation3], 4
      %s21 = int_to_ptr.vmem [resolvable:$true] %s20
      %23 = dma.hbm_to_vmem [thread:$0]  %s0, 768, %s21, [#allocation4]
    $region5: #{tpu_custom_call.1} parent=1 // pred_fallthru
      _
    // Predicated region
    $region6: #{tpu_custom_call.1} parent=1 // pred_check
      _
    $region7: #{tpu_custom_call.1} parent=1 // pred_check_branch
      %25 = sbr.rel (0) target = $region9
    $region8: #{tpu_custom_call.1} parent=1 // pred_region
      %s27 = ssub.s32 6144, 6144
      %28 = vsyncadd [#allocation7], %s27
      %s29 = sshll.u32 [#allocation6], 4
      %s30 = int_to_ptr.vmem [resolvable:$true] %s29
      %35 = dma.hbm_to_vmem [thread:$0]  %s1, 6144, %s30, [#allocation7], 64, 64, 4
    $region9: #{tpu_custom_call.1} parent=1 // pred_fallthru
      _
    // Predicated region
    $region10: #{tpu_custom_call.1} parent=1 // pred_check
      _
    $region11: #{tpu_custom_call.1} parent=1 // pred_check_branch
      %37 = sbr.rel (0) target = $region13
    $region12: #{tpu_custom_call.1} parent=1 // pred_region
      %s39 = ssub.s32 4096, 4096
      %40 = vsyncadd [#allocation7], %s39
      %s41 = sshll.u32 [#allocation8], 4
      %s42 = int_to_ptr.vmem [resolvable:$true] %s41
      %47 = dma.hbm_to_vmem [thread:$0]  %s2, 4096, %s42, [#allocation7], 256, 256, 16
    $region13: #{tpu_custom_call.1} parent=1 // pred_fallthru
      _
    // Predicated region
    $region14: #{tpu_custom_call.1} parent=1 // pred_check
      _
    $region15: #{tpu_custom_call.1} parent=1 // pred_check_branch
      %49 = sbr.rel (0) target = $region17
    $region16: #{tpu_custom_call.1} parent=1 // pred_region
      _
    $region17: #{tpu_custom_call.1} parent=1 // pred_fallthru
      _
    // Predicated region
    $region18: #{tpu_custom_call.1} parent=1 // pred_check
      _
    $region19: #{tpu_custom_call.1} parent=1 // pred_check_branch
      %51 = sbr.rel (0) target = $region21
    $region20: #{tpu_custom_call.1} parent=1 // pred_region
      %s53 = ssub.s32 4096, 4096
      %54 = vsyncadd [#allocation10], %s53
      %s55 = sshll.u32 [#allocation9], 4
      %s56 = int_to_ptr.vmem [resolvable:$true] %s55
      %61 = dma.hbm_to_vmem [thread:$0]  %s4, 4096, %s56, [#allocation10], 64, 64, 4
    $region21: #{tpu_custom_call.1} parent=1 // pred_fallthru
      _
    // Predicated region
    $region22: #{tpu_custom_call.1} parent=1 // pred_check
      _
    $region23: #{tpu_custom_call.1} parent=1 // pred_check_branch
      %63 = sbr.rel (0) target = $region25
    $region24: #{tpu_custom_call.1} parent=1 // pred_region
      %64 = dma.done [#allocation4], 768
    $region25: #{tpu_custom_call.1} parent=1 // pred_fallthru
      _
    // Predicated region
    $region26: #{tpu_custom_call.1} parent=1 // pred_check
      _
    $region27: #{tpu_custom_call.1} parent=1 // pred_check_branch
      %66 = sbr.rel (0) target = $region29
    $region28: #{tpu_custom_call.1} parent=1 // pred_region
      %67 = dma.done [#allocation7], 6144
    $region29: #{tpu_custom_call.1} parent=1 // pred_fallthru
      _
    // Predicated region
    $region30: #{tpu_custom_call.1} parent=1 // pred_check
      _
    $region31: #{tpu_custom_call.1} parent=1 // pred_check_branch
      %69 = sbr.rel (0) target = $region33
    $region32: #{tpu_custom_call.1} parent=1 // pred_region
      %70 = dma.done [#allocation7], 4096
    $region33: #{tpu_custom_call.1} parent=1 // pred_fallthru
      _
    // Predicated region
    $region34: #{tpu_custom_call.1} parent=1 // pred_check
      _
    $region35: #{tpu_custom_call.1} parent=1 // pred_check_branch
      %72 = sbr.rel (0) target = $region37
    $region36: #{tpu_custom_call.1} parent=1 // pred_region
      %73 = dma.done [#allocation10], 4096
    $region37: #{tpu_custom_call.1} parent=1 // pred_fallthru
      _
    %p75 = scmp.eq.s32.totalorder 0, 0
    // Predicated region
    $region38: #{tpu_custom_call.1} parent=1 // pred_check
      %p76 = pneg %p75
    $region39: #{tpu_custom_call.1} parent=1 // pred_check_branch
      %78 = sbr.rel (%p76) target = $region41
    $region40: #{tpu_custom_call.1} parent=1 // pred_region
      %79 = vst [vmem:[#allocation2] sm:$0xff] 0.0
    $region41: #{tpu_custom_call.1} parent=1 // pred_fallthru
      _
    %v80 = vld [vmem:[#allocation2] sm:$0xff]
    %v81 = vld [vmem:[#allocation3] sm:$0xff]
    %v82 = vld [vmem:[#allocation3 + $0x8] sm:$0xff]
    %v83 = vld [vmem:[#allocation3 + $0x10] sm:$0xff]
    %v84 = vld [vmem:[#allocation3 + $0x18] sm:$0xff]
    %v85 = vld [vmem:[#allocation3 + $0x20] sm:$0xff]
    %v86 = vld [vmem:[#allocation3 + $0x28] sm:$0xff]
    %v87 = vpack.c.bf16 %v81, %v81
    %v88 = vpack.c.bf16 %v82, %v82
    %v89 = vpack.c.bf16 %v83, %v83
    %v90 = vpack.c.bf16 %v84, %v84
    %v91 = vpack.c.bf16 %v85, %v85
    %v92 = vpack.c.bf16 %v86, %v86
    %v93 = vld [vmem:[#allocation6] sm:$0xf]
    %v94 = vld [vmem:[#allocation6 + $0x4] sm:$0xf]
    %v95 = vld [vmem:[#allocation6 + $0x8] sm:$0xf]
    %v96 = vld [vmem:[#allocation6 + $0xc] sm:$0xf]
    %v97 = vld [vmem:[#allocation6 + $0x10] sm:$0xf]
    %v98 = vld [vmem:[#allocation6 + $0x14] sm:$0xf]
    %v99 = vld [vmem:[#allocation6 + $0x18] sm:$0xf]
    %v100 = vld [vmem:[#allocation6 + $0x1c] sm:$0xf]
    %v101 = vld [vmem:[#allocation6 + $0x20] sm:$0xf]
    %v102 = vld [vmem:[#allocation6 + $0x24] sm:$0xf]
    %v103 = vld [vmem:[#allocation6 + $0x28] sm:$0xf]
    %v104 = vld [vmem:[#allocation6 + $0x2c] sm:$0xf]
    %v105 = vld [vmem:[#allocation6 + $0x30] sm:$0xf]
    %v106 = vld [vmem:[#allocation6 + $0x34] sm:$0xf]
    %v107 = vld [vmem:[#allocation6 + $0x38] sm:$0xf]
    %v108 = vld [vmem:[#allocation6 + $0x3c] sm:$0xf]
    %v109 = vld [vmem:[#allocation6 + $0x40] sm:$0xf]
    %v110 = vld [vmem:[#allocation6 + $0x44] sm:$0xf]
    %v111 = vld [vmem:[#allocation6 + $0x48] sm:$0xf]
    %v112 = vld [vmem:[#allocation6 + $0x4c] sm:$0xf]
    %v113 = vld [vmem:[#allocation6 + $0x50] sm:$0xf]
    %v114 = vld [vmem:[#allocation6 + $0x54] sm:$0xf]
    %v115 = vld [vmem:[#allocation6 + $0x58] sm:$0xf]
    %v116 = vld [vmem:[#allocation6 + $0x5c] sm:$0xf]
    %v117 = vld [vmem:[#allocation6 + $0x60] sm:$0xf]
    %v118 = vld [vmem:[#allocation6 + $0x64] sm:$0xf]
    %v119 = vld [vmem:[#allocation6 + $0x68] sm:$0xf]
    %v120 = vld [vmem:[#allocation6 + $0x6c] sm:$0xf]
    %v121 = vld [vmem:[#allocation6 + $0x70] sm:$0xf]
    %v122 = vld [vmem:[#allocation6 + $0x74] sm:$0xf]
    %v123 = vld [vmem:[#allocation6 + $0x78] sm:$0xf]
    %v124 = vld [vmem:[#allocation6 + $0x7c] sm:$0xf]
    %v125 = vld [vmem:[#allocation6 + $0x80] sm:$0xf]
    %v126 = vld [vmem:[#allocation6 + $0x84] sm:$0xf]
    %v127 = vld [vmem:[#allocation6 + $0x88] sm:$0xf]
    %v128 = vld [vmem:[#allocation6 + $0x8c] sm:$0xf]
    %v129 = vld [vmem:[#allocation6 + $0x90] sm:$0xf]
    %v130 = vld [vmem:[#allocation6 + $0x94] sm:$0xf]
    %v131 = vld [vmem:[#allocation6 + $0x98] sm:$0xf]
    %v132 = vld [vmem:[#allocation6 + $0x9c] sm:$0xf]
    %v133 = vld [vmem:[#allocation6 + $0xa0] sm:$0xf]
    %v134 = vld [vmem:[#allocation6 + $0xa4] sm:$0xf]
    %v135 = vld [vmem:[#allocation6 + $0xa8] sm:$0xf]
    %v136 = vld [vmem:[#allocation6 + $0xac] sm:$0xf]
    %v137 = vld [vmem:[#allocation6 + $0xb0] sm:$0xf]
    %v138 = vld [vmem:[#allocation6 + $0xb4] sm:$0xf]
    %v139 = vld [vmem:[#allocation6 + $0xb8] sm:$0xf]
    %v140 = vld [vmem:[#allocation6 + $0xbc] sm:$0xf]
    %v141 = vld [vmem:[#allocation6 + $0xc0] sm:$0xf]
    %v142 = vld [vmem:[#allocation6 + $0xc4] sm:$0xf]
    %v143 = vld [vmem:[#allocation6 + $0xc8] sm:$0xf]
    %v144 = vld [vmem:[#allocation6 + $0xcc] sm:$0xf]
    %v145 = vld [vmem:[#allocation6 + $0xd0] sm:$0xf]
    %v146 = vld [vmem:[#allocation6 + $0xd4] sm:$0xf]
    %v147 = vld [vmem:[#allocation6 + $0xd8] sm:$0xf]
    %v148 = vld [vmem:[#allocation6 + $0xdc] sm:$0xf]
    %v149 = vld [vmem:[#allocation6 + $0xe0] sm:$0xf]
    %v150 = vld [vmem:[#allocation6 + $0xe4] sm:$0xf]
    %v151 = vld [vmem:[#allocation6 + $0xe8] sm:$0xf]
    %v152 = vld [vmem:[#allocation6 + $0xec] sm:$0xf]
    %v153 = vld [vmem:[#allocation6 + $0xf0] sm:$0xf]
    %v154 = vld [vmem:[#allocation6 + $0xf4] sm:$0xf]
    %v155 = vld [vmem:[#allocation6 + $0xf8] sm:$0xf]
    %v156 = vld [vmem:[#allocation6 + $0xfc] sm:$0xf]
    %v157 = vld [vmem:[#allocation6 + $0x100] sm:$0xf]
    %v158 = vld [vmem:[#allocation6 + $0x104] sm:$0xf]
    %v159 = vld [vmem:[#allocation6 + $0x108] sm:$0xf]
    %v160 = vld [vmem:[#allocation6 + $0x10c] sm:$0xf]
    %v161 = vld [vmem:[#allocation6 + $0x110] sm:$0xf]
    %v162 = vld [vmem:[#allocation6 + $0x114] sm:$0xf]
    %v163 = vld [vmem:[#allocation6 + $0x118] sm:$0xf]
    %v164 = vld [vmem:[#allocation6 + $0x11c] sm:$0xf]
    %v165 = vld [vmem:[#allocation6 + $0x120] sm:$0xf]
    %v166 = vld [vmem:[#allocation6 + $0x124] sm:$0xf]
    %v167 = vld [vmem:[#allocation6 + $0x128] sm:$0xf]
    %v168 = vld [vmem:[#allocation6 + $0x12c] sm:$0xf]
    %v169 = vld [vmem:[#allocation6 + $0x130] sm:$0xf]
    %v170 = vld [vmem:[#allocation6 + $0x134] sm:$0xf]
    %v171 = vld [vmem:[#allocation6 + $0x138] sm:$0xf]
    %v172 = vld [vmem:[#allocation6 + $0x13c] sm:$0xf]
    %v173 = vld [vmem:[#allocation6 + $0x140] sm:$0xf]
    %v174 = vld [vmem:[#allocation6 + $0x144] sm:$0xf]
    %v175 = vld [vmem:[#allocation6 + $0x148] sm:$0xf]
    %v176 = vld [vmem:[#allocation6 + $0x14c] sm:$0xf]
    %v177 = vld [vmem:[#allocation6 + $0x150] sm:$0xf]
    %v178 = vld [vmem:[#allocation6 + $0x154] sm:$0xf]
    %v179 = vld [vmem:[#allocation6 + $0x158] sm:$0xf]
    %v180 = vld [vmem:[#allocation6 + $0x15c] sm:$0xf]
    %v181 = vld [vmem:[#allocation6 + $0x160] sm:$0xf]
    %v182 = vld [vmem:[#allocation6 + $0x164] sm:$0xf]
    %v183 = vld [vmem:[#allocation6 + $0x168] sm:$0xf]
    %v184 = vld [vmem:[#allocation6 + $0x16c] sm:$0xf]
    %v185 = vld [vmem:[#allocation6 + $0x170] sm:$0xf]
    %v186 = vld [vmem:[#allocation6 + $0x174] sm:$0xf]
    %v187 = vld [vmem:[#allocation6 + $0x178] sm:$0xf]
    %v188 = vld [vmem:[#allocation6 + $0x17c] sm:$0xf]
    %v285 = vunpack.c.l.b16 %v93
    %v286 = vunpack.c.l.b16 %v94
    %v287 = vunpack.c.l.b16 %v95
    %v288 = vunpack.c.l.b16 %v96
    %v289 = vunpack.c.l.b16 %v97
    %v290 = vunpack.c.l.b16 %v98
    %v291 = vunpack.c.l.b16 %v99
    %v292 = vunpack.c.l.b16 %v100
    %v293 = vunpack.c.l.b16 %v101
    %v294 = vunpack.c.l.b16 %v102
    %v295 = vunpack.c.l.b16 %v103
    %v296 = vunpack.c.l.b16 %v104
    %v297 = vunpack.c.l.b16 %v105
    %v298 = vunpack.c.l.b16 %v106
    %v299 = vunpack.c.l.b16 %v107
    %v300 = vunpack.c.l.b16 %v108
    %v301 = vunpack.c.l.b16 %v109
    %v302 = vunpack.c.l.b16 %v110
    %v303 = vunpack.c.l.b16 %v111
    %v304 = vunpack.c.l.b16 %v112
    %v305 = vunpack.c.l.b16 %v113
    %v306 = vunpack.c.l.b16 %v114
    %v307 = vunpack.c.l.b16 %v115
    %v308 = vunpack.c.l.b16 %v116
    %v309 = vunpack.c.l.b16 %v117
    %v310 = vunpack.c.l.b16 %v118
    %v311 = vunpack.c.l.b16 %v119
    %v312 = vunpack.c.l.b16 %v120
    %v313 = vunpack.c.l.b16 %v121
    %v314 = vunpack.c.l.b16 %v122
    %v315 = vunpack.c.l.b16 %v123
    %v316 = vunpack.c.l.b16 %v124
    %v317 = vunpack.c.l.b16 %v125
    %v318 = vunpack.c.l.b16 %v126
    %v319 = vunpack.c.l.b16 %v127
    %v320 = vunpack.c.l.b16 %v128
    %v321 = vunpack.c.l.b16 %v129
    %v322 = vunpack.c.l.b16 %v130
    %v323 = vunpack.c.l.b16 %v131
    %v324 = vunpack.c.l.b16 %v132
    %v325 = vunpack.c.l.b16 %v133
    %v326 = vunpack.c.l.b16 %v134
    %v327 = vunpack.c.l.b16 %v135
    %v328 = vunpack.c.l.b16 %v136
    %v329 = vunpack.c.l.b16 %v137
    %v330 = vunpack.c.l.b16 %v138
    %v331 = vunpack.c.l.b16 %v139
    %v332 = vunpack.c.l.b16 %v140
    %v333 = vunpack.c.l.b16 %v141
    %v334 = vunpack.c.l.b16 %v142
    %v335 = vunpack.c.l.b16 %v143
    %v336 = vunpack.c.l.b16 %v144
    %v337 = vunpack.c.l.b16 %v145
    %v338 = vunpack.c.l.b16 %v146
    %v339 = vunpack.c.l.b16 %v147
    %v340 = vunpack.c.l.b16 %v148
    %v341 = vunpack.c.l.b16 %v149
    %v342 = vunpack.c.l.b16 %v150
    %v343 = vunpack.c.l.b16 %v151
    %v344 = vunpack.c.l.b16 %v152
    %v345 = vunpack.c.l.b16 %v153
    %v346 = vunpack.c.l.b16 %v154
    %v347 = vunpack.c.l.b16 %v155
    %v348 = vunpack.c.l.b16 %v156
    %v349 = vunpack.c.l.b16 %v157
    %v350 = vunpack.c.l.b16 %v158
    %v351 = vunpack.c.l.b16 %v159
    %v352 = vunpack.c.l.b16 %v160
    %v353 = vunpack.c.l.b16 %v161
    %v354 = vunpack.c.l.b16 %v162
    %v355 = vunpack.c.l.b16 %v163
    %v356 = vunpack.c.l.b16 %v164
    %v357 = vunpack.c.l.b16 %v165
    %v358 = vunpack.c.l.b16 %v166
    %v359 = vunpack.c.l.b16 %v167
    %v360 = vunpack.c.l.b16 %v168
    %v361 = vunpack.c.l.b16 %v169
    %v362 = vunpack.c.l.b16 %v170
    %v363 = vunpack.c.l.b16 %v171
    %v364 = vunpack.c.l.b16 %v172
    %v365 = vunpack.c.l.b16 %v173
    %v366 = vunpack.c.l.b16 %v174
    %v367 = vunpack.c.l.b16 %v175
    %v368 = vunpack.c.l.b16 %v176
    %v369 = vunpack.c.l.b16 %v177
    %v370 = vunpack.c.l.b16 %v178
    %v371 = vunpack.c.l.b16 %v179
    %v372 = vunpack.c.l.b16 %v180
    %v373 = vunpack.c.l.b16 %v181
    %v374 = vunpack.c.l.b16 %v182
    %v375 = vunpack.c.l.b16 %v183
    %v376 = vunpack.c.l.b16 %v184
    %v377 = vunpack.c.l.b16 %v185
    %v378 = vunpack.c.l.b16 %v186
    %v379 = vunpack.c.l.b16 %v187
    %v380 = vunpack.c.l.b16 %v188
    %v381 = vpack.c.b16 %v286, %v285
    %v382 = vpack.c.b16 %v288, %v287
    %v383 = vpack.c.b16 %v290, %v289
    %v384 = vpack.c.b16 %v292, %v291
    %v385 = vpack.c.b16 %v294, %v293
    %v386 = vpack.c.b16 %v296, %v295
    %v387 = vpack.c.b16 %v298, %v297
    %v388 = vpack.c.b16 %v300, %v299
    %v389 = vpack.c.b16 %v302, %v301
    %v390 = vpack.c.b16 %v304, %v303
    %v391 = vpack.c.b16 %v306, %v305
    %v392 = vpack.c.b16 %v308, %v307
    %v393 = vpack.c.b16 %v310, %v309
    %v394 = vpack.c.b16 %v312, %v311
    %v395 = vpack.c.b16 %v314, %v313
    %v396 = vpack.c.b16 %v316, %v315
    %v397 = vpack.c.b16 %v318, %v317
    %v398 = vpack.c.b16 %v320, %v319
    %v399 = vpack.c.b16 %v322, %v321
    %v400 = vpack.c.b16 %v324, %v323
    %v401 = vpack.c.b16 %v326, %v325
    %v402 = vpack.c.b16 %v328, %v327
    %v403 = vpack.c.b16 %v330, %v329
    %v404 = vpack.c.b16 %v332, %v331
    %v405 = vpack.c.b16 %v334, %v333
    %v406 = vpack.c.b16 %v336, %v335
    %v407 = vpack.c.b16 %v338, %v337
    %v408 = vpack.c.b16 %v340, %v339
    %v409 = vpack.c.b16 %v342, %v341
    %v410 = vpack.c.b16 %v344, %v343
    %v411 = vpack.c.b16 %v346, %v345
    %v412 = vpack.c.b16 %v348, %v347
    %v413 = vpack.c.b16 %v350, %v349
    %v414 = vpack.c.b16 %v352, %v351
    %v415 = vpack.c.b16 %v354, %v353
    %v416 = vpack.c.b16 %v356, %v355
    %v417 = vpack.c.b16 %v358, %v357
    %v418 = vpack.c.b16 %v360, %v359
    %v419 = vpack.c.b16 %v362, %v361
    %v420 = vpack.c.b16 %v364, %v363
    %v421 = vpack.c.b16 %v366, %v365
    %v422 = vpack.c.b16 %v368, %v367
    %v423 = vpack.c.b16 %v370, %v369
    %v424 = vpack.c.b16 %v372, %v371
    %v425 = vpack.c.b16 %v374, %v373
    %v426 = vpack.c.b16 %v376, %v375
    %v427 = vpack.c.b16 %v378, %v377
    %v428 = vpack.c.b16 %v380, %v379
    %477 = vmatprep.subr.bf16.mxu0 0
    %478 = vmatpush1.bf16.msra.mxu0 %v381
    %479 = vmatprep.subr.bf16.mxu0 0
    %480 = vmatpush1.bf16.msra.mxu0 %v382
    %481 = vmatprep.subr.bf16.mxu0 0
    %482 = vmatpush1.bf16.msra.mxu0 %v383
    %483 = vmatprep.subr.bf16.mxu0 0
    %484 = vmatpush1.bf16.msra.mxu0 %v384
    %485 = vmatprep.subr.bf16.mxu0 0
    %486 = vmatpush1.bf16.msra.mxu0 %v385
    %487 = vmatprep.subr.bf16.mxu0 0
    %488 = vmatpush1.bf16.msra.mxu0 %v386
    %489 = vmatprep.subr.bf16.mxu0 0
    %490 = vmatpush1.bf16.msra.mxu0 %v387
    %491 = vmatprep.subr.bf16.mxu0 0
    %492 = vmatpush1.bf16.msra.mxu0 %v388
    %493 = vmatprep.subr.bf16.mxu0 0
    %494 = vmatpush1.bf16.msra.mxu0 %v389
    %495 = vmatprep.subr.bf16.mxu0 0
    %496 = vmatpush1.bf16.msra.mxu0 %v390
    %497 = vmatprep.subr.bf16.mxu0 0
    %498 = vmatpush1.bf16.msra.mxu0 %v391
    %499 = vmatprep.subr.bf16.mxu0 0
    %500 = vmatpush1.bf16.msra.mxu0 %v392
    %501 = vmatprep.subr.bf16.mxu0 0
    %502 = vmatpush1.bf16.msra.mxu0 %v393
    %503 = vmatprep.subr.bf16.mxu0 0
    %504 = vmatpush1.bf16.msra.mxu0 %v394
    %505 = vmatprep.subr.bf16.mxu0 0
    %506 = vmatpush1.bf16.msra.mxu0 %v395
    %507 = vmatprep.subr.bf16.mxu0 0
    %508 = vmatpush1.bf16.msra.mxu0 %v396
    %509 = vmatprep.mubr.bf16.mxu0 %v88
    %510 = vmatmul.mubr.bf16.gmra.mrb[0].mxu0 %v87
    %v511 = vpop.f32.mrb[0].mxu0
    %v512 = vadd.f32 0.0, %v511
    %v513 = vpop.f32.mrb[0].mxu0
    %v514 = vpop.f32.mrb[0].mxu0
    %v515 = vpop.f32.mrb[0].mxu0
    %516 = vdwg.mxu0
    %517 = vmatprep.subr.bf16.mxu0 0
    %518 = vmatpush1.bf16.msra.mxu0 %v397
    %519 = vmatprep.subr.bf16.mxu0 0
    %520 = vmatpush1.bf16.msra.mxu0 %v398
    %521 = vmatprep.subr.bf16.mxu0 0
    %522 = vmatpush1.bf16.msra.mxu0 %v399
    %523 = vmatprep.subr.bf16.mxu0 0
    %524 = vmatpush1.bf16.msra.mxu0 %v400
    %525 = vmatprep.subr.bf16.mxu0 0
    %526 = vmatpush1.bf16.msra.mxu0 %v401
    %527 = vmatprep.subr.bf16.mxu0 0
    %528 = vmatpush1.bf16.msra.mxu0 %v402
    %529 = vmatprep.subr.bf16.mxu0 0
    %530 = vmatpush1.bf16.msra.mxu0 %v403
    %531 = vmatprep.subr.bf16.mxu0 0
    %532 = vmatpush1.bf16.msra.mxu0 %v404
    %533 = vmatprep.subr.bf16.mxu0 0
    %534 = vmatpush1.bf16.msra.mxu0 %v405
    %535 = vmatprep.subr.bf16.mxu0 0
    %536 = vmatpush1.bf16.msra.mxu0 %v406
    %537 = vmatprep.subr.bf16.mxu0 0
    %538 = vmatpush1.bf16.msra.mxu0 %v407
    %539 = vmatprep.subr.bf16.mxu0 0
    %540 = vmatpush1.bf16.msra.mxu0 %v408
    %541 = vmatprep.subr.bf16.mxu0 0
    %542 = vmatpush1.bf16.msra.mxu0 %v409
    %543 = vmatprep.subr.bf16.mxu0 0
    %544 = vmatpush1.bf16.msra.mxu0 %v410
    %545 = vmatprep.subr.bf16.mxu0 0
    %546 = vmatpush1.bf16.msra.mxu0 %v411
    %547 = vmatprep.subr.bf16.mxu0 0
    %548 = vmatpush1.bf16.msra.mxu0 %v412
    %549 = vmatprep.mubr.bf16.mxu0 %v90
    %550 = vmatmul.mubr.bf16.gmra.mrb[0].mxu0 %v89
    %v551 = vpop.f32.mrb[0].mxu0
    %v552 = vadd.f32 %v512, %v551
    %v553 = vpop.f32.mrb[0].mxu0
    %v554 = vpop.f32.mrb[0].mxu0
    %v555 = vpop.f32.mrb[0].mxu0
    %556 = vdwg.mxu0
    %557 = vmatprep.subr.bf16.mxu0 0
    %558 = vmatpush1.bf16.msra.mxu0 %v413
    %559 = vmatprep.subr.bf16.mxu0 0
    %560 = vmatpush1.bf16.msra.mxu0 %v414
    %561 = vmatprep.subr.bf16.mxu0 0
    %562 = vmatpush1.bf16.msra.mxu0 %v415
    %563 = vmatprep.subr.bf16.mxu0 0
    %564 = vmatpush1.bf16.msra.mxu0 %v416
    %565 = vmatprep.subr.bf16.mxu0 0
    %566 = vmatpush1.bf16.msra.mxu0 %v417
    %567 = vmatprep.subr.bf16.mxu0 0
    %568 = vmatpush1.bf16.msra.mxu0 %v418
    %569 = vmatprep.subr.bf16.mxu0 0
    %570 = vmatpush1.bf16.msra.mxu0 %v419
    %571 = vmatprep.subr.bf16.mxu0 0
    %572 = vmatpush1.bf16.msra.mxu0 %v420
    %573 = vmatprep.subr.bf16.mxu0 0
    %574 = vmatpush1.bf16.msra.mxu0 %v421
    %575 = vmatprep.subr.bf16.mxu0 0
    %576 = vmatpush1.bf16.msra.mxu0 %v422
    %577 = vmatprep.subr.bf16.mxu0 0
    %578 = vmatpush1.bf16.msra.mxu0 %v423
    %579 = vmatprep.subr.bf16.mxu0 0
    %580 = vmatpush1.bf16.msra.mxu0 %v424
    %581 = vmatprep.subr.bf16.mxu0 0
    %582 = vmatpush1.bf16.msra.mxu0 %v425
    %583 = vmatprep.subr.bf16.mxu0 0
    %584 = vmatpush1.bf16.msra.mxu0 %v426
    %585 = vmatprep.subr.bf16.mxu0 0
    %586 = vmatpush1.bf16.msra.mxu0 %v427
    %587 = vmatprep.subr.bf16.mxu0 0
    %588 = vmatpush1.bf16.msra.mxu0 %v428
    %589 = vmatprep.mubr.bf16.mxu0 %v92
    %590 = vmatmul.mubr.bf16.gmra.mrb[0].mxu0 %v91
    %v591 = vpop.f32.mrb[0].mxu0
    %v592 = vadd.f32 %v552, %v591
    %v593 = vpop.f32.mrb[0].mxu0
    %v594 = vpop.f32.mrb[0].mxu0
    %v595 = vpop.f32.mrb[0].mxu0
    %596 = vdwg.mxu0
    %v597 = vadd.f32 %v80, %v592
    %598 = vst [vmem:[#allocation2] sm:$0xff] %v597
    // Predicated region
    $region42: #{tpu_custom_call.1} parent=1 // pred_check
      %p599 = pneg %p75
    $region43: #{tpu_custom_call.1} parent=1 // pred_check_branch
      %601 = sbr.rel (%p599) target = $region45
    $region44: #{tpu_custom_call.1} parent=1 // pred_region
      %v602 = vld [vmem:[#allocation2] sm:$0xff]
      %603 = vadd.xlane.f32.xlu0 %v602
      %v604 = vpop.xlane.xlu0 %603
      %v605 = vmul.f32 %v604, 0.03125
      %v606 = vmul.f32 %v602, %v602
      %607 = vadd.xlane.f32.xlu0 %v606
      %v608 = vpop.xlane.xlu0 %607
      %v609 = vmul.f32 %v608, 0.03125
      %v610 = vmul.f32 %v605, %v605
      %v611 = vsub.f32 %v609, %v610
      %v612 = vsub.f32 %v602, %v605
      %v613 = vadd.f32 %v611, 1e-06
      %v614 = vrsqrt.pop %v613
      %v615 = vmul.f32 %v612, %v614
      %v616 = vld [vmem:[%s3] sm:$0xf]
      %v617 = vpack.c.bf16 %v615, %v615
      %v618 = vld [vmem:[#allocation8] sm:$0xff]
      %v619 = vld [vmem:[#allocation8 + $0x8] sm:$0xff]
      %v620 = vld [vmem:[#allocation8 + $0x10] sm:$0xff]
      %v621 = vld [vmem:[#allocation8 + $0x18] sm:$0xff]
      %v622 = vld [vmem:[#allocation8 + $0x20] sm:$0xff]
      %v623 = vld [vmem:[#allocation8 + $0x28] sm:$0xff]
      %v624 = vld [vmem:[#allocation8 + $0x30] sm:$0xff]
      %v625 = vld [vmem:[#allocation8 + $0x38] sm:$0xff]
      %v626 = vld [vmem:[#allocation8 + $0x40] sm:$0xff]
      %v627 = vld [vmem:[#allocation8 + $0x48] sm:$0xff]
      %v628 = vld [vmem:[#allocation8 + $0x50] sm:$0xff]
      %v629 = vld [vmem:[#allocation8 + $0x58] sm:$0xff]
      %v630 = vld [vmem:[#allocation8 + $0x60] sm:$0xff]
      %v631 = vld [vmem:[#allocation8 + $0x68] sm:$0xff]
      %v632 = vld [vmem:[#allocation8 + $0x70] sm:$0xff]
      %v633 = vld [vmem:[#allocation8 + $0x78] sm:$0xff]
      %v634 = vld [vmem:[#allocation8 + $0x80] sm:$0xff]
      %v635 = vld [vmem:[#allocation8 + $0x88] sm:$0xff]
      %v636 = vld [vmem:[#allocation8 + $0x90] sm:$0xff]
      %v637 = vld [vmem:[#allocation8 + $0x98] sm:$0xff]
      %v638 = vld [vmem:[#allocation8 + $0xa0] sm:$0xff]
      %v639 = vld [vmem:[#allocation8 + $0xa8] sm:$0xff]
      %v640 = vld [vmem:[#allocation8 + $0xb0] sm:$0xff]
      %v641 = vld [vmem:[#allocation8 + $0xb8] sm:$0xff]
      %v642 = vld [vmem:[#allocation8 + $0xc0] sm:$0xff]
      %v643 = vld [vmem:[#allocation8 + $0xc8] sm:$0xff]
      %v644 = vld [vmem:[#allocation8 + $0xd0] sm:$0xff]
      %v645 = vld [vmem:[#allocation8 + $0xd8] sm:$0xff]
      %v646 = vld [vmem:[#allocation8 + $0xe0] sm:$0xff]
      %v647 = vld [vmem:[#allocation8 + $0xe8] sm:$0xff]
      %v648 = vld [vmem:[#allocation8 + $0xf0] sm:$0xff]
      %v649 = vld [vmem:[#allocation8 + $0xf8] sm:$0xff]
      %v651 = vlaneseq
      %v652 = vshrl.u32 %v651, 7
      %v653 = vsub.s32 0, %v652
      %v654 = vrot.slane %v616, %v653
      %v655 = vlaneseq
      %v656 = vshrl.u32 %v655, 7
      %v657 = vsub.s32 1, %v656
      %v658 = vrot.slane %v616, %v657
      %v659 = vlaneseq
      %v660 = vshrl.u32 %v659, 7
      %v661 = vsub.s32 2, %v660
      %v662 = vrot.slane %v616, %v661
      %v663 = vlaneseq
      %v664 = vshrl.u32 %v663, 7
      %v665 = vsub.s32 3, %v664
      %v666 = vrot.slane %v616, %v665
      %v703 = vunpack.c.l.b16 %v618
      %v704 = vunpack.c.h.b16 %v618
      %v705 = vunpack.c.l.b16 %v619
      %v706 = vunpack.c.h.b16 %v619
      %v707 = vunpack.c.l.b16 %v620
      %v708 = vunpack.c.h.b16 %v620
      %v709 = vunpack.c.l.b16 %v621
      %v710 = vunpack.c.h.b16 %v621
      %v711 = vunpack.c.l.b16 %v622
      %v712 = vunpack.c.h.b16 %v622
      %v713 = vunpack.c.l.b16 %v623
      %v714 = vunpack.c.h.b16 %v623
      %v715 = vunpack.c.l.b16 %v624
      %v716 = vunpack.c.h.b16 %v624
      %v717 = vunpack.c.l.b16 %v625
      %v718 = vunpack.c.h.b16 %v625
      %v719 = vunpack.c.l.b16 %v626
      %v720 = vunpack.c.h.b16 %v626
      %v721 = vunpack.c.l.b16 %v627
      %v722 = vunpack.c.h.b16 %v627
      %v723 = vunpack.c.l.b16 %v628
      %v724 = vunpack.c.h.b16 %v628
      %v725 = vunpack.c.l.b16 %v629
      %v726 = vunpack.c.h.b16 %v629
      %v727 = vunpack.c.l.b16 %v630
      %v728 = vunpack.c.h.b16 %v630
      %v729 = vunpack.c.l.b16 %v631
      %v730 = vunpack.c.h.b16 %v631
      %v731 = vunpack.c.l.b16 %v632
      %v732 = vunpack.c.h.b16 %v632
      %v733 = vunpack.c.l.b16 %v633
      %v734 = vunpack.c.h.b16 %v633
      %v735 = vunpack.c.l.b16 %v634
      %v736 = vunpack.c.h.b16 %v634
      %v737 = vunpack.c.l.b16 %v635
      %v738 = vunpack.c.h.b16 %v635
      %v739 = vunpack.c.l.b16 %v636
      %v740 = vunpack.c.h.b16 %v636
      %v741 = vunpack.c.l.b16 %v637
      %v742 = vunpack.c.h.b16 %v637
      %v743 = vunpack.c.l.b16 %v638
      %v744 = vunpack.c.h.b16 %v638
      %v745 = vunpack.c.l.b16 %v639
      %v746 = vunpack.c.h.b16 %v639
      %v747 = vunpack.c.l.b16 %v640
      %v748 = vunpack.c.h.b16 %v640
      %v749 = vunpack.c.l.b16 %v641
      %v750 = vunpack.c.h.b16 %v641
      %v751 = vunpack.c.l.b16 %v642
      %v752 = vunpack.c.h.b16 %v642
      %v753 = vunpack.c.l.b16 %v643
      %v754 = vunpack.c.h.b16 %v643
      %v755 = vunpack.c.l.b16 %v644
      %v756 = vunpack.c.h.b16 %v644
      %v757 = vunpack.c.l.b16 %v645
      %v758 = vunpack.c.h.b16 %v645
      %v759 = vunpack.c.l.b16 %v646
      %v760 = vunpack.c.h.b16 %v646
      %v761 = vunpack.c.l.b16 %v647
      %v762 = vunpack.c.h.b16 %v647
      %v763 = vunpack.c.l.b16 %v648
      %v764 = vunpack.c.h.b16 %v648
      %v765 = vunpack.c.l.b16 %v649
      %v766 = vunpack.c.h.b16 %v649
      %v767 = vpack.c.b16 %v707, %v703
      %v768 = vpack.c.b16 %v708, %v704
      %v769 = vpack.c.b16 %v709, %v705
      %v770 = vpack.c.b16 %v710, %v706
      %v771 = vpack.c.b16 %v715, %v711
      %v772 = vpack.c.b16 %v716, %v712
      %v773 = vpack.c.b16 %v717, %v713
      %v774 = vpack.c.b16 %v718, %v714
      %v775 = vpack.c.b16 %v723, %v719
      %v776 = vpack.c.b16 %v724, %v720
      %v777 = vpack.c.b16 %v725, %v721
      %v778 = vpack.c.b16 %v726, %v722
      %v779 = vpack.c.b16 %v731, %v727
      %v780 = vpack.c.b16 %v732, %v728
      %v781 = vpack.c.b16 %v733, %v729
      %v782 = vpack.c.b16 %v734, %v730
      %v783 = vpack.c.b16 %v739, %v735
      %v784 = vpack.c.b16 %v740, %v736
      %v785 = vpack.c.b16 %v741, %v737
      %v786 = vpack.c.b16 %v742, %v738
      %v787 = vpack.c.b16 %v747, %v743
      %v788 = vpack.c.b16 %v748, %v744
      %v789 = vpack.c.b16 %v749, %v745
      %v790 = vpack.c.b16 %v750, %v746
      %v791 = vpack.c.b16 %v755, %v751
      %v792 = vpack.c.b16 %v756, %v752
      %v793 = vpack.c.b16 %v757, %v753
      %v794 = vpack.c.b16 %v758, %v754
      %v795 = vpack.c.b16 %v763, %v759
      %v796 = vpack.c.b16 %v764, %v760
      %v797 = vpack.c.b16 %v765, %v761
      %v798 = vpack.c.b16 %v766, %v762
      %831 = vmatprep.subr.bf16.mxu0 %v768
      %832 = vmatpush1.bf16.msra.mxu0 %v767
      %833 = vmatprep.subr.bf16.mxu0 %v772
      %834 = vmatpush1.bf16.msra.mxu0 %v771
      %835 = vmatprep.subr.bf16.mxu0 %v776
      %836 = vmatpush1.bf16.msra.mxu0 %v775
      %837 = vmatprep.subr.bf16.mxu0 %v780
      %838 = vmatpush1.bf16.msra.mxu0 %v779
      %839 = vmatprep.subr.bf16.mxu0 %v784
      %840 = vmatpush1.bf16.msra.mxu0 %v783
      %841 = vmatprep.subr.bf16.mxu0 %v788
      %842 = vmatpush1.bf16.msra.mxu0 %v787
      %843 = vmatprep.subr.bf16.mxu0 %v792
      %844 = vmatpush1.bf16.msra.mxu0 %v791
      %845 = vmatprep.subr.bf16.mxu0 %v796
      %846 = vmatpush1.bf16.msra.mxu0 %v795
      %847 = vmatprep.subr.bf16.mxu0 0
      %848 = vmatpush1.bf16.msra.mxu0 0
      %849 = vmatprep.subr.bf16.mxu0 0
      %850 = vmatpush1.bf16.msra.mxu0 0
      %851 = vmatprep.subr.bf16.mxu0 0
      %852 = vmatpush1.bf16.msra.mxu0 0
      %853 = vmatprep.subr.bf16.mxu0 0
      %854 = vmatpush1.bf16.msra.mxu0 0
      %855 = vmatprep.subr.bf16.mxu0 0
      %856 = vmatpush1.bf16.msra.mxu0 0
      %857 = vmatprep.subr.bf16.mxu0 0
      %858 = vmatpush1.bf16.msra.mxu0 0
      %859 = vmatprep.subr.bf16.mxu0 0
      %860 = vmatpush1.bf16.msra.mxu0 0
      %861 = vmatprep.subr.bf16.mxu0 0
      %862 = vmatpush1.bf16.msra.mxu0 0
      %863 = vmatprep.mubr.bf16.mxu0 0
      %864 = vmatmul.mubr.bf16.gmra.mrb[0].mxu0 %v617
      %v865 = vpop.f32.mrb[0].mxu0
      %v866 = vadd.f32 %v654, %v865
      %v867 = vpop.f32.mrb[0].mxu0
      %v868 = vadd.f32 %v658, %v867
      %v869 = vpop.f32.mrb[0].mxu0
      %v870 = vpop.f32.mrb[0].mxu0
      %871 = vdwg.mxu0
      %872 = vmatprep.subr.bf16.mxu0 %v770
      %873 = vmatpush1.bf16.msra.mxu0 %v769
      %874 = vmatprep.subr.bf16.mxu0 %v774
      %875 = vmatpush1.bf16.msra.mxu0 %v773
      %876 = vmatprep.subr.bf16.mxu0 %v778
      %877 = vmatpush1.bf16.msra.mxu0 %v777
      %878 = vmatprep.subr.bf16.mxu0 %v782
      %879 = vmatpush1.bf16.msra.mxu0 %v781
      %880 = vmatprep.subr.bf16.mxu0 %v786
      %881 = vmatpush1.bf16.msra.mxu0 %v785
      %882 = vmatprep.subr.bf16.mxu0 %v790
      %883 = vmatpush1.bf16.msra.mxu0 %v789
      %884 = vmatprep.subr.bf16.mxu0 %v794
      %885 = vmatpush1.bf16.msra.mxu0 %v793
      %886 = vmatprep.subr.bf16.mxu0 %v798
      %887 = vmatpush1.bf16.msra.mxu0 %v797
      %888 = vmatprep.subr.bf16.mxu0 0
      %889 = vmatpush1.bf16.msra.mxu0 0
      %890 = vmatprep.subr.bf16.mxu0 0
      %891 = vmatpush1.bf16.msra.mxu0 0
      %892 = vmatprep.subr.bf16.mxu0 0
      %893 = vmatpush1.bf16.msra.mxu0 0
      %894 = vmatprep.subr.bf16.mxu0 0
      %895 = vmatpush1.bf16.msra.mxu0 0
      %896 = vmatprep.subr.bf16.mxu0 0
      %897 = vmatpush1.bf16.msra.mxu0 0
      %898 = vmatprep.subr.bf16.mxu0 0
      %899 = vmatpush1.bf16.msra.mxu0 0
      %900 = vmatprep.subr.bf16.mxu0 0
      %901 = vmatpush1.bf16.msra.mxu0 0
      %902 = vmatprep.subr.bf16.mxu0 0
      %903 = vmatpush1.bf16.msra.mxu0 0
      %904 = vmatprep.mubr.bf16.mxu0 0
      %905 = vmatmul.mubr.bf16.gmra.mrb[0].mxu0 %v617
      %v906 = vpop.f32.mrb[0].mxu0
      %v907 = vadd.f32 %v662, %v906
      %v908 = vpop.f32.mrb[0].mxu0
      %v909 = vadd.f32 %v666, %v908
      %v910 = vpop.f32.mrb[0].mxu0
      %v911 = vpop.f32.mrb[0].mxu0
      %912 = vdwg.mxu0
      %v913 = vmul.f32 %v866, 0.5
      %v914 = vmul.f32 %v868, 0.5
      %v915 = vmul.f32 %v907, 0.5
      %v916 = vmul.f32 %v909, 0.5
      %v917 = vmul.f32 %v866, 0.70710677
      %v918 = vmul.f32 %v868, 0.70710677
      %v919 = vmul.f32 %v907, 0.70710677
      %v920 = vmul.f32 %v909, 0.70710677
      %v921 = verf.f32.pop %v917
      %v922 = verf.f32.pop %v918
      %v923 = verf.f32.pop %v919
      %v924 = verf.f32.pop %v920
      %v925 = vadd.f32 %v921, 1.0
      %v926 = vadd.f32 %v922, 1.0
      %v927 = vadd.f32 %v923, 1.0
      %v928 = vadd.f32 %v924, 1.0
      %v929 = vmul.f32 %v913, %v925
      %v930 = vmul.f32 %v914, %v926
      %v931 = vmul.f32 %v915, %v927
      %v932 = vmul.f32 %v916, %v928
      %v933 = vld [vmem:[%s3 + $0x4] sm:$0x1]
      %v934 = vpack.c.bf16 %v929, %v929
      %v935 = vpack.c.bf16 %v930, %v930
      %v936 = vpack.c.bf16 %v931, %v931
      %v937 = vpack.c.bf16 %v932, %v932
      %v938 = vld [vmem:[#allocation9] sm:$0xf]
      %v939 = vld [vmem:[#allocation9 + $0x4] sm:$0xf]
      %v940 = vld [vmem:[#allocation9 + $0x8] sm:$0xf]
      %v941 = vld [vmem:[#allocation9 + $0xc] sm:$0xf]
      %v942 = vld [vmem:[#allocation9 + $0x10] sm:$0xf]
      %v943 = vld [vmem:[#allocation9 + $0x14] sm:$0xf]
      %v944 = vld [vmem:[#allocation9 + $0x18] sm:$0xf]
      %v945 = vld [vmem:[#allocation9 + $0x1c] sm:$0xf]
      %v946 = vld [vmem:[#allocation9 + $0x20] sm:$0xf]
      %v947 = vld [vmem:[#allocation9 + $0x24] sm:$0xf]
      %v948 = vld [vmem:[#allocation9 + $0x28] sm:$0xf]
      %v949 = vld [vmem:[#allocation9 + $0x2c] sm:$0xf]
      %v950 = vld [vmem:[#allocation9 + $0x30] sm:$0xf]
      %v951 = vld [vmem:[#allocation9 + $0x34] sm:$0xf]
      %v952 = vld [vmem:[#allocation9 + $0x38] sm:$0xf]
      %v953 = vld [vmem:[#allocation9 + $0x3c] sm:$0xf]
      %v954 = vld [vmem:[#allocation9 + $0x40] sm:$0xf]
      %v955 = vld [vmem:[#allocation9 + $0x44] sm:$0xf]
      %v956 = vld [vmem:[#allocation9 + $0x48] sm:$0xf]
      %v957 = vld [vmem:[#allocation9 + $0x4c] sm:$0xf]
      %v958 = vld [vmem:[#allocation9 + $0x50] sm:$0xf]
      %v959 = vld [vmem:[#allocation9 + $0x54] sm:$0xf]
      %v960 = vld [vmem:[#allocation9 + $0x58] sm:$0xf]
      %v961 = vld [vmem:[#allocation9 + $0x5c] sm:$0xf]
      %v962 = vld [vmem:[#allocation9 + $0x60] sm:$0xf]
      %v963 = vld [vmem:[#allocation9 + $0x64] sm:$0xf]
      %v964 = vld [vmem:[#allocation9 + $0x68] sm:$0xf]
      %v965 = vld [vmem:[#allocation9 + $0x6c] sm:$0xf]
      %v966 = vld [vmem:[#allocation9 + $0x70] sm:$0xf]
      %v967 = vld [vmem:[#allocation9 + $0x74] sm:$0xf]
      %v968 = vld [vmem:[#allocation9 + $0x78] sm:$0xf]
      %v969 = vld [vmem:[#allocation9 + $0x7c] sm:$0xf]
      %v970 = vld [vmem:[#allocation9 + $0x80] sm:$0xf]
      %v971 = vld [vmem:[#allocation9 + $0x84] sm:$0xf]
      %v972 = vld [vmem:[#allocation9 + $0x88] sm:$0xf]
      %v973 = vld [vmem:[#allocation9 + $0x8c] sm:$0xf]
      %v974 = vld [vmem:[#allocation9 + $0x90] sm:$0xf]
      %v975 = vld [vmem:[#allocation9 + $0x94] sm:$0xf]
      %v976 = vld [vmem:[#allocation9 + $0x98] sm:$0xf]
      %v977 = vld [vmem:[#allocation9 + $0x9c] sm:$0xf]
      %v978 = vld [vmem:[#allocation9 + $0xa0] sm:$0xf]
      %v979 = vld [vmem:[#allocation9 + $0xa4] sm:$0xf]
      %v980 = vld [vmem:[#allocation9 + $0xa8] sm:$0xf]
      %v981 = vld [vmem:[#allocation9 + $0xac] sm:$0xf]
      %v982 = vld [vmem:[#allocation9 + $0xb0] sm:$0xf]
      %v983 = vld [vmem:[#allocation9 + $0xb4] sm:$0xf]
      %v984 = vld [vmem:[#allocation9 + $0xb8] sm:$0xf]
      %v985 = vld [vmem:[#allocation9 + $0xbc] sm:$0xf]
      %v986 = vld [vmem:[#allocation9 + $0xc0] sm:$0xf]
      %v987 = vld [vmem:[#allocation9 + $0xc4] sm:$0xf]
      %v988 = vld [vmem:[#allocation9 + $0xc8] sm:$0xf]
      %v989 = vld [vmem:[#allocation9 + $0xcc] sm:$0xf]
      %v990 = vld [vmem:[#allocation9 + $0xd0] sm:$0xf]
      %v991 = vld [vmem:[#allocation9 + $0xd4] sm:$0xf]
      %v992 = vld [vmem:[#allocation9 + $0xd8] sm:$0xf]
      %v993 = vld [vmem:[#allocation9 + $0xdc] sm:$0xf]
      %v994 = vld [vmem:[#allocation9 + $0xe0] sm:$0xf]
      %v995 = vld [vmem:[#allocation9 + $0xe4] sm:$0xf]
      %v996 = vld [vmem:[#allocation9 + $0xe8] sm:$0xf]
      %v997 = vld [vmem:[#allocation9 + $0xec] sm:$0xf]
      %v998 = vld [vmem:[#allocation9 + $0xf0] sm:$0xf]
      %v999 = vld [vmem:[#allocation9 + $0xf4] sm:$0xf]
      %v1000 = vld [vmem:[#allocation9 + $0xf8] sm:$0xf]
      %v1001 = vld [vmem:[#allocation9 + $0xfc] sm:$0xf]
      %v1003 = vlaneseq
      %v1004 = vshrl.u32 %v1003, 7
      %v1005 = vsub.s32 0, %v1004
      %v1006 = vrot.slane %v933, %v1005
      %v1072 = vunpack.c.l.b16 %v938
      %v1073 = vunpack.c.l.b16 %v939
      %v1074 = vunpack.c.l.b16 %v940
      %v1075 = vunpack.c.l.b16 %v941
      %v1076 = vunpack.c.l.b16 %v942
      %v1077 = vunpack.c.l.b16 %v943
      %v1078 = vunpack.c.l.b16 %v944
      %v1079 = vunpack.c.l.b16 %v945
      %v1080 = vunpack.c.l.b16 %v946
      %v1081 = vunpack.c.l.b16 %v947
      %v1082 = vunpack.c.l.b16 %v948
      %v1083 = vunpack.c.l.b16 %v949
      %v1084 = vunpack.c.l.b16 %v950
      %v1085 = vunpack.c.l.b16 %v951
      %v1086 = vunpack.c.l.b16 %v952
      %v1087 = vunpack.c.l.b16 %v953
      %v1088 = vunpack.c.l.b16 %v954
      %v1089 = vunpack.c.l.b16 %v955
      %v1090 = vunpack.c.l.b16 %v956
      %v1091 = vunpack.c.l.b16 %v957
      %v1092 = vunpack.c.l.b16 %v958
      %v1093 = vunpack.c.l.b16 %v959
      %v1094 = vunpack.c.l.b16 %v960
      %v1095 = vunpack.c.l.b16 %v961
      %v1096 = vunpack.c.l.b16 %v962
      %v1097 = vunpack.c.l.b16 %v963
      %v1098 = vunpack.c.l.b16 %v964
      %v1099 = vunpack.c.l.b16 %v965
      %v1100 = vunpack.c.l.b16 %v966
      %v1101 = vunpack.c.l.b16 %v967
      %v1102 = vunpack.c.l.b16 %v968
      %v1103 = vunpack.c.l.b16 %v969
      %v1104 = vunpack.c.l.b16 %v970
      %v1105 = vunpack.c.l.b16 %v971
      %v1106 = vunpack.c.l.b16 %v972
      %v1107 = vunpack.c.l.b16 %v973
      %v1108 = vunpack.c.l.b16 %v974
      %v1109 = vunpack.c.l.b16 %v975
      %v1110 = vunpack.c.l.b16 %v976
      %v1111 = vunpack.c.l.b16 %v977
      %v1112 = vunpack.c.l.b16 %v978
      %v1113 = vunpack.c.l.b16 %v979
      %v1114 = vunpack.c.l.b16 %v980
      %v1115 = vunpack.c.l.b16 %v981
      %v1116 = vunpack.c.l.b16 %v982
      %v1117 = vunpack.c.l.b16 %v983
      %v1118 = vunpack.c.l.b16 %v984
      %v1119 = vunpack.c.l.b16 %v985
      %v1120 = vunpack.c.l.b16 %v986
      %v1121 = vunpack.c.l.b16 %v987
      %v1122 = vunpack.c.l.b16 %v988
      %v1123 = vunpack.c.l.b16 %v989
      %v1124 = vunpack.c.l.b16 %v990
      %v1125 = vunpack.c.l.b16 %v991
      %v1126 = vunpack.c.l.b16 %v992
      %v1127 = vunpack.c.l.b16 %v993
      %v1128 = vunpack.c.l.b16 %v994
      %v1129 = vunpack.c.l.b16 %v995
      %v1130 = vunpack.c.l.b16 %v996
      %v1131 = vunpack.c.l.b16 %v997
      %v1132 = vunpack.c.l.b16 %v998
      %v1133 = vunpack.c.l.b16 %v999
      %v1134 = vunpack.c.l.b16 %v1000
      %v1135 = vunpack.c.l.b16 %v1001
      %v1136 = vpack.c.b16 %v1073, %v1072
      %v1137 = vpack.c.b16 %v1075, %v1074
      %v1138 = vpack.c.b16 %v1077, %v1076
      %v1139 = vpack.c.b16 %v1079, %v1078
      %v1140 = vpack.c.b16 %v1081, %v1080
      %v1141 = vpack.c.b16 %v1083, %v1082
      %v1142 = vpack.c.b16 %v1085, %v1084
      %v1143 = vpack.c.b16 %v1087, %v1086
      %v1144 = vpack.c.b16 %v1089, %v1088
      %v1145 = vpack.c.b16 %v1091, %v1090
      %v1146 = vpack.c.b16 %v1093, %v1092
      %v1147 = vpack.c.b16 %v1095, %v1094
      %v1148 = vpack.c.b16 %v1097, %v1096
      %v1149 = vpack.c.b16 %v1099, %v1098
      %v1150 = vpack.c.b16 %v1101, %v1100
      %v1151 = vpack.c.b16 %v1103, %v1102
      %v1152 = vpack.c.b16 %v1105, %v1104
      %v1153 = vpack.c.b16 %v1107, %v1106
      %v1154 = vpack.c.b16 %v1109, %v1108
      %v1155 = vpack.c.b16 %v1111, %v1110
      %v1156 = vpack.c.b16 %v1113, %v1112
      %v1157 = vpack.c.b16 %v1115, %v1114
      %v1158 = vpack.c.b16 %v1117, %v1116
      %v1159 = vpack.c.b16 %v1119, %v1118
      %v1160 = vpack.c.b16 %v1121, %v1120
      %v1161 = vpack.c.b16 %v1123, %v1122
      %v1162 = vpack.c.b16 %v1125, %v1124
      %v1163 = vpack.c.b16 %v1127, %v1126
      %v1164 = vpack.c.b16 %v1129, %v1128
      %v1165 = vpack.c.b16 %v1131, %v1130
      %v1166 = vpack.c.b16 %v1133, %v1132
      %v1167 = vpack.c.b16 %v1135, %v1134
      %1200 = vmatprep.subr.bf16.mxu0 0
      %1201 = vmatpush1.bf16.msra.mxu0 %v1136
      %1202 = vmatprep.subr.bf16.mxu0 0
      %1203 = vmatpush1.bf16.msra.mxu0 %v1137
      %1204 = vmatprep.subr.bf16.mxu0 0
      %1205 = vmatpush1.bf16.msra.mxu0 %v1138
      %1206 = vmatprep.subr.bf16.mxu0 0
      %1207 = vmatpush1.bf16.msra.mxu0 %v1139
      %1208 = vmatprep.subr.bf16.mxu0 0
      %1209 = vmatpush1.bf16.msra.mxu0 %v1140
      %1210 = vmatprep.subr.bf16.mxu0 0
      %1211 = vmatpush1.bf16.msra.mxu0 %v1141
      %1212 = vmatprep.subr.bf16.mxu0 0
      %1213 = vmatpush1.bf16.msra.mxu0 %v1142
      %1214 = vmatprep.subr.bf16.mxu0 0
      %1215 = vmatpush1.bf16.msra.mxu0 %v1143
      %1216 = vmatprep.subr.bf16.mxu0 0
      %1217 = vmatpush1.bf16.msra.mxu0 %v1144
      %1218 = vmatprep.subr.bf16.mxu0 0
      %1219 = vmatpush1.bf16.msra.mxu0 %v1145
      %1220 = vmatprep.subr.bf16.mxu0 0
      %1221 = vmatpush1.bf16.msra.mxu0 %v1146
      %1222 = vmatprep.subr.bf16.mxu0 0
      %1223 = vmatpush1.bf16.msra.mxu0 %v1147
      %1224 = vmatprep.subr.bf16.mxu0 0
      %1225 = vmatpush1.bf16.msra.mxu0 %v1148
      %1226 = vmatprep.subr.bf16.mxu0 0
      %1227 = vmatpush1.bf16.msra.mxu0 %v1149
      %1228 = vmatprep.subr.bf16.mxu0 0
      %1229 = vmatpush1.bf16.msra.mxu0 %v1150
      %1230 = vmatprep.subr.bf16.mxu0 0
      %1231 = vmatpush1.bf16.msra.mxu0 %v1151
      %1232 = vmatprep.mubr.bf16.mxu0 %v935
      %1233 = vmatmul.mubr.bf16.gmra.mrb[0].mxu0 %v934
      %v1234 = vpop.f32.mrb[0].mxu0
      %v1235 = vadd.f32 %v1006, %v1234
      %v1236 = vpop.f32.mrb[0].mxu0
      %v1237 = vpop.f32.mrb[0].mxu0
      %v1238 = vpop.f32.mrb[0].mxu0
      %1239 = vdwg.mxu0
      %1240 = vmatprep.subr.bf16.mxu0 0
      %1241 = vmatpush1.bf16.msra.mxu0 %v1152
      %1242 = vmatprep.subr.bf16.mxu0 0
      %1243 = vmatpush1.bf16.msra.mxu0 %v1153
      %1244 = vmatprep.subr.bf16.mxu0 0
      %1245 = vmatpush1.bf16.msra.mxu0 %v1154
      %1246 = vmatprep.subr.bf16.mxu0 0
      %1247 = vmatpush1.bf16.msra.mxu0 %v1155
      %1248 = vmatprep.subr.bf16.mxu0 0
      %1249 = vmatpush1.bf16.msra.mxu0 %v1156
      %1250 = vmatprep.subr.bf16.mxu0 0
      %1251 = vmatpush1.bf16.msra.mxu0 %v1157
      %1252 = vmatprep.subr.bf16.mxu0 0
      %1253 = vmatpush1.bf16.msra.mxu0 %v1158
      %1254 = vmatprep.subr.bf16.mxu0 0
      %1255 = vmatpush1.bf16.msra.mxu0 %v1159
      %1256 = vmatprep.subr.bf16.mxu0 0
      %1257 = vmatpush1.bf16.msra.mxu0 %v1160
      %1258 = vmatprep.subr.bf16.mxu0 0
      %1259 = vmatpush1.bf16.msra.mxu0 %v1161
      %1260 = vmatprep.subr.bf16.mxu0 0
      %1261 = vmatpush1.bf16.msra.mxu0 %v1162
      %1262 = vmatprep.subr.bf16.mxu0 0
      %1263 = vmatpush1.bf16.msra.mxu0 %v1163
      %1264 = vmatprep.subr.bf16.mxu0 0
      %1265 = vmatpush1.bf16.msra.mxu0 %v1164
      %1266 = vmatprep.subr.bf16.mxu0 0
      %1267 = vmatpush1.bf16.msra.mxu0 %v1165
      %1268 = vmatprep.subr.bf16.mxu0 0
      %1269 = vmatpush1.bf16.msra.mxu0 %v1166
      %1270 = vmatprep.subr.bf16.mxu0 0
      %1271 = vmatpush1.bf16.msra.mxu0 %v1167
      %1272 = vmatprep.mubr.bf16.mxu0 %v937
      %1273 = vmatmul.mubr.bf16.gmra.mrb[0].mxu0 %v936
      %v1274 = vpop.f32.mrb[0].mxu0
      %v1275 = vadd.f32 %v1235, %v1274
      %v1276 = vpop.f32.mrb[0].mxu0
      %v1277 = vpop.f32.mrb[0].mxu0
      %v1278 = vpop.f32.mrb[0].mxu0
      %1279 = vdwg.mxu0
      %v1280 = vtanh.pop %v1275
      %1281 = vst [vmem:[#allocation11] sm:$0xff] %v1280
    $region45: #{tpu_custom_call.1} parent=1 // pred_fallthru
      _
    // Predicated region
    $region46: #{tpu_custom_call.1} parent=1 // pred_check
      _
    $region47: #{tpu_custom_call.1} parent=1 // pred_check_branch
      %1283 = sbr.rel (0) target = $region49
    $region48: #{tpu_custom_call.1} parent=1 // pred_region
      %s1285 = ssub.s32 128, 128
      %1286 = vsyncadd [#allocation5], %s1285
      %s1288 = sshll.u32 [#allocation11], 4
      %s1289 = int_to_ptr.vmem [resolvable:$true] %s1288
      %1291 = dma.vmem_to_hbm [thread:$0]  %s1289, 128, %s5, [#allocation5]
    $region49: #{tpu_custom_call.1} parent=1 // pred_fallthru
      _
    // Predicated region
    $region50: #{tpu_custom_call.1} parent=1 // pred_check
      _
    $region51: #{tpu_custom_call.1} parent=1 // pred_check_branch
      %1293 = sbr.rel (0) target = $region53
    $region52: #{tpu_custom_call.1} parent=1 // pred_region
      %1294 = dma.done [#allocation5], 128
    $region53: #{tpu_custom_call.1} parent=1 // pred_fallthru
      _
    %1295 = vsyncpa [#allocation4], 1
    %1296 = vsyncpa [#allocation7], 1
    %1297 = vsyncpa [#allocation10], 1
    %1298 = vsyncpa [#allocation5], 1

</llo_original>
